<compile_context>
chip_gen: v7x
topology: tpu7x:2x2x1
jax: 0.10.0
libtpu: 0.0.40
codegen_flags: <defaults>
</compile_context>

<pallas_src>
import jax
import jax.numpy as jnp
from jax.experimental import pallas as pl
from jax.experimental.pallas import tpu as pltpu

BS = 64           # "batch_size" in the module == rows after reshape == conv1 out-channels
N_FEATURES = 4
N_OUTPUTS = 2
BN_EPS = 1e-5
N_LAYERS = 6
W_DTYPE = jnp.bfloat16   # MXU operand dtype (accumulation stays f32)

# (C_in, C_out) per fused layer, in forward order.
LAYER_DIMS = (
    (N_FEATURES, BS),      # conv1: Conv1d(4, 64, k=1)    + BN + ReLU (MaxPool1d(1) = id)
    (BS, 2 * BS),          # conv2: Conv1d(64, 128, k=1)  + BN + ReLU (Dropout/MaxPool = id)
    (2 * BS, 4 * BS),      # conv3: Conv1d(128, 256, k=1) + BN + ReLU (Dropout = id)
    (4 * BS, BS),          # conv4: Conv1d(256, 64, k=1)  + BN + ReLU
    (BS, BS),              # layer: Linear(64, 64) + ReLU
    (BS, N_OUTPUTS),       # output: Linear(64, 2)
)

# ---------------- tight packing metadata (all static Python ints) ----------------
CIN_PAD = (16, 64, 128, 256, 64, 64)        # K padded to bf16 sublane multiple (16)
COUT_PAD = (128, 128, 256, 128, 128, 128)   # N padded to 128 (layer 3 truly needs 256)
W128_LAYERS = (0, 1, 3, 4, 5)               # layers stored in the 128-lane slab
W128_OFF = {}
_row = 0
for _i in W128_LAYERS:
    W128_OFF[_i] = _row                     # 0, 16, 80, 336, 400  (all multiples of 16)
    _row += CIN_PAD[_i]
W128_ROWS = _row                            # 464
BIAS_LANES = 256                            # bias slab lane width (max C_out)


# ------------------------------------ kernel ------------------------------------

def _mlp_kernel(x_ref, w128_ref, w256_ref, b_ref, o_ref):
    """One sample of the fused 6-layer MLP.

    x_ref:    (BS, 4)     f32   raw input sample (no wrapper-side padding).
    w128_ref: (464, 128)  bf16  tightly packed weights of layers 1, 2, 4, 5, 6.
    w256_ref: (128, 256)  bf16  layer-3 weight.
    b_ref:    (6, 256)    f32   per-layer bias, zero padded (f32 for the VPU).
    o_ref:    (BS, 2)     f32   logits.

    Padded weight columns / bias lanes are zero, so padded activation lanes stay
    exactly zero through matmul + bias + ReLU; each matmul slices its LHS back to
    the real contraction width, so padded lanes never feed the MXU.
    """
    x = x_ref[...]                                                  # (BS, 4)  f32
    b = b_ref[...]                                                  # (6, 256) f32

    # Layer 1 (conv1, 4->64): K = 4, so four rank-1 VPU updates in f32 beat
    # pushing a padded 16-row weight through the MXU and keep the tiny first
    # layer in full precision (also removes any need to pad x).
    w1 = w128_ref[pl.ds(W128_OFF[0], 16), :].astype(jnp.float32)    # (16, 128); rows >= 4 are 0
    acc = x[:, 0:1] * w1[0:1, :]
    for k in range(1, N_FEATURES):                                  # static unroll
        acc = acc + x[:, k:k + 1] * w1[k:k + 1, :]
    h = jnp.maximum(acc + b[0:1, :128], 0.0)                        # (BS, 128), lanes >= 64 are 0

    def dense(h, w, b_row, relu):
        # bf16 MXU matmul with f32 accumulation; bias add + ReLU stay f32 (VPU).
        a = jnp.dot(h.astype(W_DTYPE), w, preferred_element_type=jnp.float32) + b_row
        return jnp.maximum(a, 0.0) if relu else a

    # Static Python unroll of layers 2..6 so layer i's VPU epilogue can overlap
    # layer i+1's MXU weight push.
    # Layer 2 (conv2, 64 -> 128)
    h = dense(h[:, :64], w128_ref[pl.ds(W128_OFF[1], 64), :], b[1:2, :128], True)
    # Layer 3 (conv3, 128 -> 256)
    h = dense(h, w256_ref[...], b[2:3, :], True)
    # Layer 4 (conv4, 256 -> 64)
    h = dense(h, w128_ref[pl.ds(W128_OFF[3], 256), :], b[3:4, :128], True)
    # Layer 5 (Linear 64 -> 64 + ReLU)
    h = dense(h[:, :64], w128_ref[pl.ds(W128_OFF[4], 64), :], b[4:5, :128], True)
    # Layer 6 (Linear 64 -> 2), no ReLU
    h = dense(h[:, :64], w128_ref[pl.ds(W128_OFF[5], 64), :], b[5:6, :128], False)

    o_ref[...] = h[:, :N_OUTPUTS]          # 2-lane masked store: negligible at 64 rows


def _pallas_forward(xs, w128, w256, bias):
    """xs: (S, BS, N_FEATURES) f32 -> (S, BS, N_OUTPUTS) f32.

    Grid over the sample axis: weight/bias slabs use constant index maps so they
    are DMA'd into VMEM once and stay resident across the whole grid; only the
    tiny per-sample input/output blocks rotate through the pipeline.
    """
    s_count = xs.shape[0]
    return pl.pallas_call(
        _mlp_kernel,
        out_shape=jax.ShapeDtypeStruct((s_count, BS, N_OUTPUTS), jnp.float32),
        grid_spec=pltpu.PrefetchScalarGridSpec(
            num_scalar_prefetch=0,
            grid=(s_count,),
            in_specs=[
                pl.BlockSpec((None, BS, N_FEATURES), lambda s: (s, 0, 0)),   # per-sample x
                pl.BlockSpec((W128_ROWS, 128), lambda s: (0, 0)),            # resident weights
                pl.BlockSpec((128, 256), lambda s: (0, 0)),                  # resident layer-3 W
                pl.BlockSpec((N_LAYERS, BIAS_LANES), lambda s: (0, 0)),      # resident bias
            ],
            out_specs=pl.BlockSpec((None, BS, N_OUTPUTS), lambda s: (s, 0, 0)),
        ),
        compiler_params=pltpu.CompilerParams(
            # Samples are independent -> shard across TensorCores on v7x; the 6
            # dependent layers of one sample stay on one core.
            dimension_semantics=("parallel",),
        ),
    )(xs, w128, w256, bias)


@jax.jit
def log1dnet_v3_forward(x, w128, w256, bias):
    """Single module-equivalent forward: x is anything with BS*N_FEATURES elements
    (mirrors torch's x.reshape(bs, features, 1)).  Returns (BS, N_OUTPUTS)."""
    x1 = jnp.reshape(x, (1, BS, N_FEATURES)).astype(jnp.float32)
    return _pallas_forward(x1, w128, w256, bias)[0]


@jax.jit
def log1dnet_v3_forward_batched(xs, w128, w256, bias):
    """Batched forward over independent samples: (S, BS, N_FEATURES) -> (S, BS, N_OUTPUTS)."""
    return _pallas_forward(xs.astype(jnp.float32), w128, w256, bias)


# ------------------------------ parameter handling ------------------------------

def _uniform_init(key, shape, fan_in):
    # PyTorch default Conv1d / Linear init: U(-1/sqrt(fan_in), 1/sqrt(fan_in))
    bound = 1.0 / jnp.sqrt(jnp.float32(fan_in))
    return jax.random.uniform(key, shape, jnp.float32, -bound, bound)


def _fold_bn(w_t, b, gamma, beta, mean, var):
    """Fold eval-mode BatchNorm1d into the preceding 1x1 conv.
    w_t: (C_in, C_out), b: (C_out,).  y = x @ (w_t*s) + ((b-mean)*s + beta), s = gamma/sqrt(var+eps)."""
    s = gamma / jnp.sqrt(var + BN_EPS)
    return w_t * s[None, :], (b - mean) * s + beta


def init_params(seed=0):
    """Per-layer (W (C_in, C_out), b (C_out,)) with eval-mode BatchNorm folded into conv1..conv4.
    NOTE: uses fresh running stats (mean=0, var=1); for a trained checkpoint pass the real
    running_mean / running_var (and gamma/beta) into _fold_bn instead."""
    keys = jax.random.split(jax.random.PRNGKey(seed), 2 * N_LAYERS)
    params = []
    for i, (cin, cout) in enumerate(LAYER_DIMS):
        w = _uniform_init(keys[2 * i], (cin, cout), cin)       # pre-transposed (C_in, C_out)
        b = _uniform_init(keys[2 * i + 1], (cout,), cin)
        if i < 4:  # the four conv blocks carry BatchNorm1d
            gamma = jnp.ones((cout,), jnp.float32)
            beta = jnp.zeros((cout,), jnp.float32)
            mean = jnp.zeros((cout,), jnp.float32)
            var = jnp.ones((cout,), jnp.float32)
            w, b = _fold_bn(w, b, gamma, beta, mean, var)
        params.append((w, b))
    return tuple(params)


def pack_params(params):
    """Pack the 12 small arrays into two tight bf16 weight slabs + one f32 bias slab
    (~180 KiB + 6 KiB total).  Done once; slabs stay resident across calls.  The bias
    stays a separate f32 operand so bias add / ReLU run in f32 on the VPU (v5e has no
    bf16 VALU) without bitcast tricks."""
    w128 = jnp.zeros((W128_ROWS, 128), jnp.float32)
    w256 = jnp.zeros((128, 256), jnp.float32)
    bias = jnp.zeros((N_LAYERS, BIAS_LANES), jnp.float32)
    for i, ((w, b), (cin, cout)) in enumerate(zip(params, LAYER_DIMS)):
        bias = bias.at[i, :cout].set(b)
        if i == 2:
            w256 = w256.at[:cin, :cout].set(w)
        else:
            off = W128_OFF[i]
            w128 = w128.at[off:off + cin, :cout].set(w)
    return w128.astype(W_DTYPE), w256.astype(W_DTYPE), bias


# ---------------------------------- references ----------------------------------

def _reference_forward_f32(x, params):
    """Full-precision unpacked reference (module semantics, eval mode)."""
    h = jnp.reshape(x, (BS, N_FEATURES)).astype(jnp.float32)
    for i, (w, b) in enumerate(params):
        h = h @ w + b[None, :]
        if i < N_LAYERS - 1:
            h = jnp.maximum(h, 0.0)
    return h


def _reference_forward_packed(x, w128, w256, bias):
    """Pure-JAX mirror of the exact packed/bf16 math the kernel performs."""
    x2 = jnp.reshape(x, (BS, N_FEATURES)).astype(jnp.float32)
    w128f = w128.astype(jnp.float32)

    w1 = w128f[W128_OFF[0]:W128_OFF[0] + N_FEATURES, :]              # (4, 128) f32
    h = jnp.maximum(x2 @ w1 + bias[0:1, :128], 0.0)

    def dense(h, w_bf16, b_row, relu):
        a = jnp.dot(h.astype(W_DTYPE), w_bf16, preferred_element_type=jnp.float32) + b_row
        return jnp.maximum(a, 0.0) if relu else a

    h = dense(h[:, :64], w128[W128_OFF[1]:W128_OFF[1] + 64, :], bias[1:2, :128], True)
    h = dense(h, w256, bias[2:3, :], True)
    h = dense(h, w128[W128_OFF[3]:W128_OFF[3] + 256, :], bias[3:4, :128], True)
    h = dense(h[:, :64], w128[W128_OFF[4]:W128_OFF[4] + 64, :], bias[4:5, :128], True)
    h = dense(h[:, :64], w128[W128_OFF[5]:W128_OFF[5] + 64, :], bias[5:6, :128], False)
    return h[:, :N_OUTPUTS]


if __name__ == "__main__":
    params = init_params(seed=0)
    w128, w256, bias = pack_params(params)   # packed / BN-folded once, reused every call

    # Single module-style input: (bs=64, n_features=4, 1), as torch reshapes it.
    x = jax.random.normal(jax.random.PRNGKey(0), (BS, N_FEATURES, 1), jnp.float32)
    out = jax.block_until_ready(log1dnet_v3_forward(x, w128, w256, bias))
    assert out.shape == (BS, N_OUTPUTS), out.shape

    # Tight check against the identical packed bf16 math.
    ref_packed = _reference_forward_packed(x, w128, w256, bias)
    assert jnp.allclose(out, ref_packed, atol=2e-3, rtol=2e-3), "mismatch vs packed reference"

    # Looser check against the full-precision unpacked module math (bf16 MXU operands).
    ref_f32 = _reference_forward_f32(x, params)
    assert jnp.allclose(out, ref_f32, atol=5e-2, rtol=5e-2), "mismatch vs f32 reference"

    # Batched path: the sample-axis grid keeps the weight slabs VMEM-resident and
    # (on v7x) shards samples across both TensorCores.
    xs = jax.random.normal(jax.random.PRNGKey(1), (8, BS, N_FEATURES), jnp.float32)
    outs = jax.block_until_ready(log1dnet_v3_forward_batched(xs, w128, w256, bias))
    assert outs.shape == (8, BS, N_OUTPUTS), outs.shape
    refs = jnp.stack([_reference_forward_packed(xs[i], w128, w256, bias) for i in range(8)])
    assert jnp.allclose(outs, refs, atol=2e-3, rtol=2e-3), "mismatch vs packed reference (batched)"

    print("KERNEL_OK")
</pallas_src>

<mosaic_0001>
module attributes {stable_mosaic.version = 11 : i64} {
  func.func @_mlp_kernel(%arg0: i32, %arg1: memref<1x64x4xf32, #tpu.memory_space<vmem>>, %arg2: memref<464x128xbf16, #tpu.memory_space<vmem>>, %arg3: memref<128x256xbf16, #tpu.memory_space<vmem>>, %arg4: memref<6x256xf32, #tpu.memory_space<vmem>>, %arg5: memref<1x64x2xf32, #tpu.memory_space<vmem>>) attributes {dimension_semantics = [#tpu.dimension_semantics<parallel>], iteration_bounds = array<i64: 1>, scalar_prefetch = 0 : i64, scratch_operands = 0 : i64, tpu.core_type = #tpu.core_type<tc>, window_params = [{transform_indices = @transform_0, window_bounds = array<i64: 1, 64, 4>}, {pipeline_mode = #tpu.pipeline_mode<synchronous>, transform_indices = @transform_1, window_bounds = array<i64: 464, 128>}, {pipeline_mode = #tpu.pipeline_mode<synchronous>, transform_indices = @transform_2, window_bounds = array<i64: 128, 256>}, {pipeline_mode = #tpu.pipeline_mode<synchronous>, transform_indices = @transform_3, window_bounds = array<i64: 6, 256>}, {transform_indices = @transform_4, window_bounds = array<i64: 1, 64, 2>}]} {
    %c0 = arith.constant 0 : index
    %c0_0 = arith.constant 0 : index
    %c0_1 = arith.constant 0 : index
    %0 = vector.load %arg1[%c0, %c0_0, %c0_1] : memref<1x64x4xf32, #tpu.memory_space<vmem>>, vector<1x64x4xf32>
    %1 = vector.shape_cast %0 : vector<1x64x4xf32> to vector<64x4xf32>
    %c0_2 = arith.constant 0 : index
    %c0_3 = arith.constant 0 : index
    %2 = vector.load %arg4[%c0_2, %c0_3] : memref<6x256xf32, #tpu.memory_space<vmem>>, vector<6x256xf32>
    %c0_4 = arith.constant 0 : index
    %c0_5 = arith.constant 0 : index
    %3 = vector.load %arg2[%c0_4, %c0_5] : memref<464x128xbf16, #tpu.memory_space<vmem>>, vector<16x128xbf16>
    %4 = arith.extf %3 : vector<16x128xbf16> to vector<16x128xf32>
    %5 = vector.extract_strided_slice %1 {offsets = [0, 0], sizes = [64, 1], strides = [1, 1]} : vector<64x4xf32> to vector<64x1xf32>
    %6 = vector.extract_strided_slice %4 {offsets = [0, 0], sizes = [1, 128], strides = [1, 1]} : vector<16x128xf32> to vector<1x128xf32>
    %7 = vector.broadcast %5 : vector<64x1xf32> to vector<64x128xf32>
    %8 = vector.broadcast %6 : vector<1x128xf32> to vector<64x128xf32>
    %9 = arith.mulf %7, %8 : vector<64x128xf32>
    %10 = vector.extract_strided_slice %1 {offsets = [0, 1], sizes = [64, 1], strides = [1, 1]} : vector<64x4xf32> to vector<64x1xf32>
    %11 = vector.extract_strided_slice %4 {offsets = [1, 0], sizes = [1, 128], strides = [1, 1]} : vector<16x128xf32> to vector<1x128xf32>
    %12 = vector.broadcast %10 : vector<64x1xf32> to vector<64x128xf32>
    %13 = vector.broadcast %11 : vector<1x128xf32> to vector<64x128xf32>
    %14 = arith.mulf %12, %13 : vector<64x128xf32>
    %15 = arith.addf %9, %14 : vector<64x128xf32>
    %16 = vector.extract_strided_slice %1 {offsets = [0, 2], sizes = [64, 1], strides = [1, 1]} : vector<64x4xf32> to vector<64x1xf32>
    %17 = vector.extract_strided_slice %4 {offsets = [2, 0], sizes = [1, 128], strides = [1, 1]} : vector<16x128xf32> to vector<1x128xf32>
    %18 = vector.broadcast %16 : vector<64x1xf32> to vector<64x128xf32>
    %19 = vector.broadcast %17 : vector<1x128xf32> to vector<64x128xf32>
    %20 = arith.mulf %18, %19 : vector<64x128xf32>
    %21 = arith.addf %15, %20 : vector<64x128xf32>
    %22 = vector.extract_strided_slice %1 {offsets = [0, 3], sizes = [64, 1], strides = [1, 1]} : vector<64x4xf32> to vector<64x1xf32>
    %23 = vector.extract_strided_slice %4 {offsets = [3, 0], sizes = [1, 128], strides = [1, 1]} : vector<16x128xf32> to vector<1x128xf32>
    %24 = vector.broadcast %22 : vector<64x1xf32> to vector<64x128xf32>
    %25 = vector.broadcast %23 : vector<1x128xf32> to vector<64x128xf32>
    %26 = arith.mulf %24, %25 : vector<64x128xf32>
    %27 = arith.addf %21, %26 : vector<64x128xf32>
    %28 = vector.extract_strided_slice %2 {offsets = [0, 0], sizes = [1, 128], strides = [1, 1]} : vector<6x256xf32> to vector<1x128xf32>
    %29 = vector.broadcast %28 : vector<1x128xf32> to vector<64x128xf32>
    %30 = arith.addf %27, %29 : vector<64x128xf32>
    %cst = arith.constant 0.000000e+00 : f32
    %31 = vector.broadcast %cst : f32 to vector<64x128xf32>
    %32 = arith.maximumf %30, %31 : vector<64x128xf32>
    %33 = vector.extract_strided_slice %32 {offsets = [0, 0], sizes = [64, 64], strides = [1, 1]} : vector<64x128xf32> to vector<64x64xf32>
    %c16 = arith.constant 16 : index
    %c0_6 = arith.constant 0 : index
    %34 = vector.load %arg2[%c16, %c0_6] : memref<464x128xbf16, #tpu.memory_space<vmem>>, vector<64x128xbf16>
    %35 = vector.extract_strided_slice %2 {offsets = [1, 0], sizes = [1, 128], strides = [1, 1]} : vector<6x256xf32> to vector<1x128xf32>
    %36 = arith.truncf %33 : vector<64x64xf32> to vector<64x64xbf16>
    %cst_7 = arith.constant dense<0.000000e+00> : vector<64x128xf32>
    %37 = tpu.matmul %36, %34, %cst_7 {dimension_numbers = #tpu.dot_dimension_numbers<[1], [0], [0], [1], [0, 0, 1, 1], [], []>} : vector<64x64xbf16>, vector<64x128xbf16>, vector<64x128xf32> -> vector<64x128xf32>
    %38 = vector.broadcast %35 : vector<1x128xf32> to vector<64x128xf32>
    %39 = arith.addf %37, %38 : vector<64x128xf32>
    %cst_8 = arith.constant 0.000000e+00 : f32
    %40 = vector.broadcast %cst_8 : f32 to vector<64x128xf32>
    %41 = arith.maximumf %39, %40 : vector<64x128xf32>
    %c0_9 = arith.constant 0 : index
    %c0_10 = arith.constant 0 : index
    %42 = vector.load %arg3[%c0_9, %c0_10] : memref<128x256xbf16, #tpu.memory_space<vmem>>, vector<128x256xbf16>
    %43 = vector.extract_strided_slice %2 {offsets = [2, 0], sizes = [1, 256], strides = [1, 1]} : vector<6x256xf32> to vector<1x256xf32>
    %44 = arith.truncf %41 : vector<64x128xf32> to vector<64x128xbf16>
    %cst_11 = arith.constant dense<0.000000e+00> : vector<64x256xf32>
    %45 = tpu.matmul %44, %42, %cst_11 {dimension_numbers = #tpu.dot_dimension_numbers<[1], [0], [0], [1], [0, 0, 1, 1], [], []>} : vector<64x128xbf16>, vector<128x256xbf16>, vector<64x256xf32> -> vector<64x256xf32>
    %46 = vector.broadcast %43 : vector<1x256xf32> to vector<64x256xf32>
    %47 = arith.addf %45, %46 : vector<64x256xf32>
    %cst_12 = arith.constant 0.000000e+00 : f32
    %48 = vector.broadcast %cst_12 : f32 to vector<64x256xf32>
    %49 = arith.maximumf %47, %48 : vector<64x256xf32>
    %c80 = arith.constant 80 : index
    %c0_13 = arith.constant 0 : index
    %50 = vector.load %arg2[%c80, %c0_13] : memref<464x128xbf16, #tpu.memory_space<vmem>>, vector<256x128xbf16>
    %51 = vector.extract_strided_slice %2 {offsets = [3, 0], sizes = [1, 128], strides = [1, 1]} : vector<6x256xf32> to vector<1x128xf32>
    %52 = arith.truncf %49 : vector<64x256xf32> to vector<64x256xbf16>
    %cst_14 = arith.constant dense<0.000000e+00> : vector<64x128xf32>
    %53 = tpu.matmul %52, %50, %cst_14 {dimension_numbers = #tpu.dot_dimension_numbers<[1], [0], [0], [1], [0, 0, 1, 1], [], []>} : vector<64x256xbf16>, vector<256x128xbf16>, vector<64x128xf32> -> vector<64x128xf32>
    %54 = vector.broadcast %51 : vector<1x128xf32> to vector<64x128xf32>
    %55 = arith.addf %53, %54 : vector<64x128xf32>
    %cst_15 = arith.constant 0.000000e+00 : f32
    %56 = vector.broadcast %cst_15 : f32 to vector<64x128xf32>
    %57 = arith.maximumf %55, %56 : vector<64x128xf32>
    %58 = vector.extract_strided_slice %57 {offsets = [0, 0], sizes = [64, 64], strides = [1, 1]} : vector<64x128xf32> to vector<64x64xf32>
    %c336 = arith.constant 336 : index
    %c0_16 = arith.constant 0 : index
    %59 = vector.load %arg2[%c336, %c0_16] : memref<464x128xbf16, #tpu.memory_space<vmem>>, vector<64x128xbf16>
    %60 = vector.extract_strided_slice %2 {offsets = [4, 0], sizes = [1, 128], strides = [1, 1]} : vector<6x256xf32> to vector<1x128xf32>
    %61 = arith.truncf %58 : vector<64x64xf32> to vector<64x64xbf16>
    %cst_17 = arith.constant dense<0.000000e+00> : vector<64x128xf32>
    %62 = tpu.matmul %61, %59, %cst_17 {dimension_numbers = #tpu.dot_dimension_numbers<[1], [0], [0], [1], [0, 0, 1, 1], [], []>} : vector<64x64xbf16>, vector<64x128xbf16>, vector<64x128xf32> -> vector<64x128xf32>
    %63 = vector.broadcast %60 : vector<1x128xf32> to vector<64x128xf32>
    %64 = arith.addf %62, %63 : vector<64x128xf32>
    %cst_18 = arith.constant 0.000000e+00 : f32
    %65 = vector.broadcast %cst_18 : f32 to vector<64x128xf32>
    %66 = arith.maximumf %64, %65 : vector<64x128xf32>
    %67 = vector.extract_strided_slice %66 {offsets = [0, 0], sizes = [64, 64], strides = [1, 1]} : vector<64x128xf32> to vector<64x64xf32>
    %c400 = arith.constant 400 : index
    %c0_19 = arith.constant 0 : index
    %68 = vector.load %arg2[%c400, %c0_19] : memref<464x128xbf16, #tpu.memory_space<vmem>>, vector<64x128xbf16>
    %69 = vector.extract_strided_slice %2 {offsets = [5, 0], sizes = [1, 128], strides = [1, 1]} : vector<6x256xf32> to vector<1x128xf32>
    %70 = arith.truncf %67 : vector<64x64xf32> to vector<64x64xbf16>
    %cst_20 = arith.constant dense<0.000000e+00> : vector<64x128xf32>
    %71 = tpu.matmul %70, %68, %cst_20 {dimension_numbers = #tpu.dot_dimension_numbers<[1], [0], [0], [1], [0, 0, 1, 1], [], []>} : vector<64x64xbf16>, vector<64x128xbf16>, vector<64x128xf32> -> vector<64x128xf32>
    %72 = vector.broadcast %69 : vector<1x128xf32> to vector<64x128xf32>
    %73 = arith.addf %71, %72 : vector<64x128xf32>
    %74 = vector.extract_strided_slice %73 {offsets = [0, 0], sizes = [64, 2], strides = [1, 1]} : vector<64x128xf32> to vector<64x2xf32>
    %c0_21 = arith.constant 0 : index
    %c0_22 = arith.constant 0 : index
    %c0_23 = arith.constant 0 : index
    %75 = vector.load %arg5[%c0_21, %c0_22, %c0_23] : memref<1x64x2xf32, #tpu.memory_space<vmem>>, vector<1x64x2xf32>
    %76 = vector.shape_cast %75 : vector<1x64x2xf32> to vector<64x2xf32>
    %77 = vector.shape_cast %74 : vector<64x2xf32> to vector<1x64x2xf32>
    tpu.vector_store %arg5[%c0_21, %c0_22, %c0_23], %77 {strides = array<i32>} : memref<1x64x2xf32, #tpu.memory_space<vmem>>, vector<1x64x2xf32>,
    return
  }
  func.func @transform_0(%arg0: i32) -> (i32, i32, i32) {
    %c0_i32 = arith.constant 0 : i32
    %c0_i32_0 = arith.constant 0 : i32
    %c0_i32_1 = arith.constant 0 : i32
    return %arg0, %c0_i32, %c0_i32_0 : i32, i32, i32
  }
  func.func @transform_1(%arg0: i32) -> (i32, i32) {
    %c0_i32 = arith.constant 0 : i32
    %c0_i32_0 = arith.constant 0 : i32
    %c0_i32_1 = arith.constant 0 : i32
    return %c0_i32, %c0_i32_0 : i32, i32
  }
  func.func @transform_2(%arg0: i32) -> (i32, i32) {
    %c0_i32 = arith.constant 0 : i32
    %c0_i32_0 = arith.constant 0 : i32
    %c0_i32_1 = arith.constant 0 : i32
    return %c0_i32, %c0_i32_0 : i32, i32
  }
  func.func @transform_3(%arg0: i32) -> (i32, i32) {
    %c0_i32 = arith.constant 0 : i32
    %c0_i32_0 = arith.constant 0 : i32
    %c0_i32_1 = arith.constant 0 : i32
    return %c0_i32, %c0_i32_0 : i32, i32
  }
  func.func @transform_4(%arg0: i32) -> (i32, i32, i32) {
    %c0_i32 = arith.constant 0 : i32
    %c0_i32_0 = arith.constant 0 : i32
    %c0_i32_1 = arith.constant 0 : i32
    return %arg0, %c0_i32, %c0_i32_0 : i32, i32, i32
  }
}

</mosaic_0001>

<llo_original>
// kernel: log1dnet_v3_forward.1
$region0: #{log1dnet_v3_forward.1}
  #allocation0 [shape = 'u32[]', space=smem, size = 0x4, offset = 0x4, fixed_abs, tag = 'smem constant byte address 0x4 - core index']
  #allocation1 [shape = 'u32[144,128]{1,0:T(1,128)}', space=vmem, size = 0x12000, scoped, tag = 'internal scratch']
  %s0 = inlined_call_operand.vmem [shape: f32[1,64,4], index: 0, kind: input, shape index: {}]
  %s1 = inlined_call_operand.hbm [shape: bf16[464,128], index: 1, kind: input, shape index: {}]
  %s2 = inlined_call_operand.hbm [shape: bf16[128,256], index: 2, kind: input, shape index: {}]
  %s3 = inlined_call_operand.vmem [shape: f32[6,256], index: 3, kind: input, shape index: {}]
  %s4 = inlined_call_operand.vmem [shape: f32[1,64,2], index: 4, kind: output, shape index: {}]
  %s5 = sld [smem:[#allocation0]]
  $region34: #{log1dnet_v3_forward.1} parent=0
    _
  %s7 = ssub.s32 1, %s5
  %s8 = scalar_select 0, %s7, %s5
  $region1: #{log1dnet_v3_forward.1} parent=0
    #allocation2 [shape = 'u8[118784]{0}', space=vmem, size = 0x1d000, scoped, tag = 'input window, operand 1, single buffered']
    #allocation3 [shape = 's32[1]{0}', space=sflag, size = 0x4, scoped, tag = 'scoped memory for log1dnet_v3_forward.1']
    #allocation4 [shape = 'u8[65536]{0}', space=vmem, size = 0x10000, scoped, tag = 'input window, operand 2, single buffered']
    #allocation5 [shape = 's32[1]{0}', space=sflag, size = 0x4, scoped, tag = 'scoped memory for log1dnet_v3_forward.1']
    %9 = vsyncpa [#allocation3], 0
    %10 = vsyncpa [#allocation5], 0
    // Predicated region
    $region2: #{log1dnet_v3_forward.1} parent=1 // pred_check
      _
    $region3: #{log1dnet_v3_forward.1} parent=1 // pred_check_branch
      %12 = sbr.rel (0) target = $region5
    $region4: #{log1dnet_v3_forward.1} parent=1 // pred_region
      _
    $region5: #{log1dnet_v3_forward.1} parent=1 // pred_fallthru
      _
    // Predicated region
    $region6: #{log1dnet_v3_forward.1} parent=1 // pred_check
      _
    $region7: #{log1dnet_v3_forward.1} parent=1 // pred_check_branch
      %14 = sbr.rel (0) target = $region9
    $region8: #{log1dnet_v3_forward.1} parent=1 // pred_region
      %s16 = ssub.s32 3712, 3712
      %17 = vsyncadd [#allocation3], %s16
      %s18 = sshll.u32 [#allocation2], 4
      %s19 = int_to_ptr.vmem [resolvable:$true] %s18
      %24 = dma.hbm_to_vmem [thread:$0]  %s1, 3712, %s19, [#allocation3], 64, 64, 4
    $region9: #{log1dnet_v3_forward.1} parent=1 // pred_fallthru
      _
    // Predicated region
    $region10: #{log1dnet_v3_forward.1} parent=1 // pred_check
      _
    $region11: #{log1dnet_v3_forward.1} parent=1 // pred_check_branch
      %26 = sbr.rel (0) target = $region13
    $region12: #{log1dnet_v3_forward.1} parent=1 // pred_region
      %s28 = ssub.s32 2048, 2048
      %29 = vsyncadd [#allocation5], %s28
      %s30 = sshll.u32 [#allocation4], 4
      %s31 = int_to_ptr.vmem [resolvable:$true] %s30
      %36 = dma.hbm_to_vmem [thread:$0]  %s2, 2048, %s31, [#allocation5], 128, 128, 8
    $region13: #{log1dnet_v3_forward.1} parent=1 // pred_fallthru
      _
    // Predicated region
    $region14: #{log1dnet_v3_forward.1} parent=1 // pred_check
      _
    $region15: #{log1dnet_v3_forward.1} parent=1 // pred_check_branch
      %38 = sbr.rel (0) target = $region17
    $region16: #{log1dnet_v3_forward.1} parent=1 // pred_region
      _
    $region17: #{log1dnet_v3_forward.1} parent=1 // pred_fallthru
      _
    // Predicated region
    $region18: #{log1dnet_v3_forward.1} parent=1 // pred_check
      _
    $region19: #{log1dnet_v3_forward.1} parent=1 // pred_check_branch
      %40 = sbr.rel (0) target = $region21
    $region20: #{log1dnet_v3_forward.1} parent=1 // pred_region
      %41 = dma.done [#allocation3], 3712
    $region21: #{log1dnet_v3_forward.1} parent=1 // pred_fallthru
      _
    // Predicated region
    $region22: #{log1dnet_v3_forward.1} parent=1 // pred_check
      _
    $region23: #{log1dnet_v3_forward.1} parent=1 // pred_check_branch
      %43 = sbr.rel (0) target = $region25
    $region24: #{log1dnet_v3_forward.1} parent=1 // pred_region
      %44 = dma.done [#allocation5], 2048
    $region25: #{log1dnet_v3_forward.1} parent=1 // pred_fallthru
      _
    %v46 = vld [vmem:[%s0] sm:$0xff]
    %v47 = vld [vmem:[%s0 + $0x8] sm:$0xff]
    %v48 = vld [vmem:[%s0 + $0x10] sm:$0xff]
    %v49 = vld [vmem:[%s0 + $0x18] sm:$0xff]
    %v50 = vld [vmem:[%s0 + $0x20] sm:$0xff]
    %v51 = vld [vmem:[%s0 + $0x28] sm:$0xff]
    %v52 = vld [vmem:[%s0 + $0x30] sm:$0xff]
    %v53 = vld [vmem:[%s0 + $0x38] sm:$0xff]
    %v54 = vld [vmem:[%s3] sm:$0x3f]
    %v55 = vld [vmem:[%s3 + $0x8] sm:$0x3f]
    %v56 = vld [vmem:[#allocation2] sm:$0xf]
    %v57 = vunpack.c.l.bf16 %v56
    %59 = vset.pattern.permute.xlu0 0
    %60 = vperm.xlu0 %59, %v46
    %v61 = vpop.permute.xlu0 %60
    %64 = vset.pattern.permute.xlu0 0
    %65 = vperm.xlu0 %64, %v47
    %v66 = vpop.permute.xlu0 %65
    %69 = vset.pattern.permute.xlu0 0
    %70 = vperm.xlu0 %69, %v48
    %v71 = vpop.permute.xlu0 %70
    %74 = vset.pattern.permute.xlu0 0
    %75 = vperm.xlu0 %74, %v49
    %v76 = vpop.permute.xlu0 %75
    %79 = vset.pattern.permute.xlu0 0
    %80 = vperm.xlu0 %79, %v50
    %v81 = vpop.permute.xlu0 %80
    %84 = vset.pattern.permute.xlu0 0
    %85 = vperm.xlu0 %84, %v51
    %v86 = vpop.permute.xlu0 %85
    %89 = vset.pattern.permute.xlu0 0
    %90 = vperm.xlu0 %89, %v52
    %v91 = vpop.permute.xlu0 %90
    %94 = vset.pattern.permute.xlu0 0
    %95 = vperm.xlu0 %94, %v53
    %v96 = vpop.permute.xlu0 %95
    %v98 = vlaneseq
    %v99 = vshrl.u32 %v98, 7
    %v100 = vsub.s32 0, %v99
    %v101 = vrot.slane %v57, %v100
    %v102 = vmul.f32 %v61, %v101
    %v103 = vmul.f32 %v66, %v101
    %v104 = vmul.f32 %v71, %v101
    %v105 = vmul.f32 %v76, %v101
    %v106 = vmul.f32 %v81, %v101
    %v107 = vmul.f32 %v86, %v101
    %v108 = vmul.f32 %v91, %v101
    %v109 = vmul.f32 %v96, %v101
    %110 = vset.pattern.permute.xlu0 1
    %111 = vperm.xlu0 %110, %v46
    %v112 = vpop.permute.xlu0 %111
    %114 = vset.pattern.permute.xlu0 1
    %115 = vperm.xlu0 %114, %v47
    %v116 = vpop.permute.xlu0 %115
    %118 = vset.pattern.permute.xlu0 1
    %119 = vperm.xlu0 %118, %v48
    %v120 = vpop.permute.xlu0 %119
    %122 = vset.pattern.permute.xlu0 1
    %123 = vperm.xlu0 %122, %v49
    %v124 = vpop.permute.xlu0 %123
    %126 = vset.pattern.permute.xlu0 1
    %127 = vperm.xlu0 %126, %v50
    %v128 = vpop.permute.xlu0 %127
    %130 = vset.pattern.permute.xlu0 1
    %131 = vperm.xlu0 %130, %v51
    %v132 = vpop.permute.xlu0 %131
    %134 = vset.pattern.permute.xlu0 1
    %135 = vperm.xlu0 %134, %v52
    %v136 = vpop.permute.xlu0 %135
    %138 = vset.pattern.permute.xlu0 1
    %139 = vperm.xlu0 %138, %v53
    %v140 = vpop.permute.xlu0 %139
    %v142 = vlaneseq
    %v143 = vshrl.u32 %v142, 7
    %v144 = vsub.s32 1, %v143
    %v145 = vrot.slane %v57, %v144
    %v146 = vmul.f32 %v112, %v145
    %v147 = vmul.f32 %v116, %v145
    %v148 = vmul.f32 %v120, %v145
    %v149 = vmul.f32 %v124, %v145
    %v150 = vmul.f32 %v128, %v145
    %v151 = vmul.f32 %v132, %v145
    %v152 = vmul.f32 %v136, %v145
    %v153 = vmul.f32 %v140, %v145
    %v154 = vadd.f32 %v102, %v146
    %v155 = vadd.f32 %v103, %v147
    %v156 = vadd.f32 %v104, %v148
    %v157 = vadd.f32 %v105, %v149
    %v158 = vadd.f32 %v106, %v150
    %v159 = vadd.f32 %v107, %v151
    %v160 = vadd.f32 %v108, %v152
    %v161 = vadd.f32 %v109, %v153
    %162 = vset.pattern.permute.xlu0 2
    %163 = vperm.xlu0 %162, %v46
    %v164 = vpop.permute.xlu0 %163
    %166 = vset.pattern.permute.xlu0 2
    %167 = vperm.xlu0 %166, %v47
    %v168 = vpop.permute.xlu0 %167
    %170 = vset.pattern.permute.xlu0 2
    %171 = vperm.xlu0 %170, %v48
    %v172 = vpop.permute.xlu0 %171
    %174 = vset.pattern.permute.xlu0 2
    %175 = vperm.xlu0 %174, %v49
    %v176 = vpop.permute.xlu0 %175
    %178 = vset.pattern.permute.xlu0 2
    %179 = vperm.xlu0 %178, %v50
    %v180 = vpop.permute.xlu0 %179
    %182 = vset.pattern.permute.xlu0 2
    %183 = vperm.xlu0 %182, %v51
    %v184 = vpop.permute.xlu0 %183
    %186 = vset.pattern.permute.xlu0 2
    %187 = vperm.xlu0 %186, %v52
    %v188 = vpop.permute.xlu0 %187
    %190 = vset.pattern.permute.xlu0 2
    %191 = vperm.xlu0 %190, %v53
    %v192 = vpop.permute.xlu0 %191
    %v194 = vlaneseq
    %v195 = vshrl.u32 %v194, 7
    %v196 = vsub.s32 2, %v195
    %v197 = vrot.slane %v57, %v196
    %v198 = vmul.f32 %v164, %v197
    %v199 = vmul.f32 %v168, %v197
    %v200 = vmul.f32 %v172, %v197
    %v201 = vmul.f32 %v176, %v197
    %v202 = vmul.f32 %v180, %v197
    %v203 = vmul.f32 %v184, %v197
    %v204 = vmul.f32 %v188, %v197
    %v205 = vmul.f32 %v192, %v197
    %v206 = vadd.f32 %v154, %v198
    %v207 = vadd.f32 %v155, %v199
    %v208 = vadd.f32 %v156, %v200
    %v209 = vadd.f32 %v157, %v201
    %v210 = vadd.f32 %v158, %v202
    %v211 = vadd.f32 %v159, %v203
    %v212 = vadd.f32 %v160, %v204
    %v213 = vadd.f32 %v161, %v205
    %214 = vset.pattern.permute.xlu0 3
    %215 = vperm.xlu0 %214, %v46
    %v216 = vpop.permute.xlu0 %215
    %218 = vset.pattern.permute.xlu0 3
    %219 = vperm.xlu0 %218, %v47
    %v220 = vpop.permute.xlu0 %219
    %222 = vset.pattern.permute.xlu0 3
    %223 = vperm.xlu0 %222, %v48
    %v224 = vpop.permute.xlu0 %223
    %226 = vset.pattern.permute.xlu0 3
    %227 = vperm.xlu0 %226, %v49
    %v228 = vpop.permute.xlu0 %227
    %230 = vset.pattern.permute.xlu0 3
    %231 = vperm.xlu0 %230, %v50
    %v232 = vpop.permute.xlu0 %231
    %234 = vset.pattern.permute.xlu0 3
    %235 = vperm.xlu0 %234, %v51
    %v236 = vpop.permute.xlu0 %235
    %238 = vset.pattern.permute.xlu0 3
    %239 = vperm.xlu0 %238, %v52
    %v240 = vpop.permute.xlu0 %239
    %242 = vset.pattern.permute.xlu0 3
    %243 = vperm.xlu0 %242, %v53
    %v244 = vpop.permute.xlu0 %243
    %v246 = vlaneseq
    %v247 = vshrl.u32 %v246, 7
    %v248 = vsub.s32 3, %v247
    %v249 = vrot.slane %v57, %v248
    %v250 = vmul.f32 %v216, %v249
    %v251 = vmul.f32 %v220, %v249
    %v252 = vmul.f32 %v224, %v249
    %v253 = vmul.f32 %v228, %v249
    %v254 = vmul.f32 %v232, %v249
    %v255 = vmul.f32 %v236, %v249
    %v256 = vmul.f32 %v240, %v249
    %v257 = vmul.f32 %v244, %v249
    %v258 = vadd.f32 %v206, %v250
    %v259 = vadd.f32 %v207, %v251
    %v260 = vadd.f32 %v208, %v252
    %v261 = vadd.f32 %v209, %v253
    %v262 = vadd.f32 %v210, %v254
    %v263 = vadd.f32 %v211, %v255
    %v264 = vadd.f32 %v212, %v256
    %v265 = vadd.f32 %v213, %v257
    %v266 = vlaneseq
    %v267 = vshrl.u32 %v266, 7
    %v268 = vsub.s32 0, %v267
    %v269 = vrot.slane %v54, %v268
    %v270 = vadd.f32 %v258, %v269
    %v271 = vadd.f32 %v259, %v269
    %v272 = vadd.f32 %v260, %v269
    %v273 = vadd.f32 %v261, %v269
    %v274 = vadd.f32 %v262, %v269
    %v275 = vadd.f32 %v263, %v269
    %v276 = vadd.f32 %v264, %v269
    %v277 = vadd.f32 %v265, %v269
    %v278 = vmax.f32 %v270, 0.0
    %v279 = vmax.f32 %v271, 0.0
    %v280 = vmax.f32 %v272, 0.0
    %v281 = vmax.f32 %v273, 0.0
    %v282 = vmax.f32 %v274, 0.0
    %v283 = vmax.f32 %v275, 0.0
    %v284 = vmax.f32 %v276, 0.0
    %v285 = vmax.f32 %v277, 0.0
    %v286 = vld [vmem:[#allocation2 + $0x8] sm:$0xf]
    %v287 = vld [vmem:[#allocation2 + $0xc] sm:$0xf]
    %v288 = vld [vmem:[#allocation2 + $0x10] sm:$0xf]
    %v289 = vld [vmem:[#allocation2 + $0x14] sm:$0xf]
    %v290 = vld [vmem:[#allocation2 + $0x18] sm:$0xf]
    %v291 = vld [vmem:[#allocation2 + $0x1c] sm:$0xf]
    %v292 = vld [vmem:[#allocation2 + $0x20] sm:$0xf]
    %v293 = vld [vmem:[#allocation2 + $0x24] sm:$0xf]
    %v294 = vpack.c.bf16 %v279, %v278
    %v295 = vpack.c.bf16 %v281, %v280
    %v296 = vpack.c.bf16 %v283, %v282
    %v297 = vpack.c.bf16 %v285, %v284
    %v298 = vlaneseq
    %v299 = vshrl.u32 %v298, 7
    %v300 = vsub.s32 1, %v299
    %v301 = vrot.slane %v54, %v300
    %v310 = vunpack.c.l.b16 %v286
    %v311 = vunpack.c.l.b16 %v287
    %v312 = vunpack.c.l.b16 %v288
    %v313 = vunpack.c.l.b16 %v289
    %v314 = vunpack.c.l.b16 %v290
    %v315 = vunpack.c.l.b16 %v291
    %v316 = vunpack.c.l.b16 %v292
    %v317 = vunpack.c.l.b16 %v293
    %v318 = vpack.c.b16 %v311, %v310
    %v319 = vpack.c.b16 %v313, %v312
    %v320 = vpack.c.b16 %v315, %v314
    %v321 = vpack.c.b16 %v317, %v316
    %vm326 = vcmask 523264
    %v328 = vsel %vm326, %v294, 0
    %v331 = vsel %vm326, %v295, 0
    %v334 = vsel %vm326, %v296, 0
    %v337 = vsel %vm326, %v297, 0
    %339 = vmatprep.subr.bf16.mxu0 0
    %340 = vmatpush1.bf16.msra.mxu0 %v318
    %341 = vmatprep.subr.bf16.mxu0 0
    %342 = vmatpush1.bf16.msra.mxu0 %v319
    %343 = vmatprep.subr.bf16.mxu0 0
    %344 = vmatpush1.bf16.msra.mxu0 %v320
    %345 = vmatprep.subr.bf16.mxu0 0
    %346 = vmatpush1.bf16.msra.mxu0 %v321
    %347 = vmatprep.subr.bf16.mxu0 0
    %348 = vmatpush1.bf16.msra.mxu0 0
    %349 = vmatprep.subr.bf16.mxu0 0
    %350 = vmatpush1.bf16.msra.mxu0 0
    %351 = vmatprep.subr.bf16.mxu0 0
    %352 = vmatpush1.bf16.msra.mxu0 0
    %353 = vmatprep.subr.bf16.mxu0 0
    %354 = vmatpush1.bf16.msra.mxu0 0
    %355 = vmatprep.subr.bf16.mxu0 0
    %356 = vmatpush1.bf16.msra.mxu0 0
    %357 = vmatprep.subr.bf16.mxu0 0
    %358 = vmatpush1.bf16.msra.mxu0 0
    %359 = vmatprep.subr.bf16.mxu0 0
    %360 = vmatpush1.bf16.msra.mxu0 0
    %361 = vmatprep.subr.bf16.mxu0 0
    %362 = vmatpush1.bf16.msra.mxu0 0
    %363 = vmatprep.subr.bf16.mxu0 0
    %364 = vmatpush1.bf16.msra.mxu0 0
    %365 = vmatprep.subr.bf16.mxu0 0
    %366 = vmatpush1.bf16.msra.mxu0 0
    %367 = vmatprep.subr.bf16.mxu0 0
    %368 = vmatpush1.bf16.msra.mxu0 0
    %369 = vmatprep.subr.bf16.mxu0 0
    %370 = vmatpush1.bf16.msra.mxu0 0
    %371 = vmatprep.mubr.bf16.mxu0 0
    %372 = vmatmul.mubr.bf16.gmra.mrb[0].mxu0 %v328
    %v373 = vpop.f32.mrb[0].mxu0
    %v374 = vadd.f32 %v301, %v373
    %v375 = vpop.f32.mrb[0].mxu0
    %v376 = vpop.f32.mrb[0].mxu0
    %v377 = vadd.f32 %v301, %v376
    %v378 = vpop.f32.mrb[0].mxu0
    %379 = vmatprep.mubr.bf16.mxu0 0
    %380 = vmatmul.mubr.bf16.gmra.mrb[0].mxu0 %v331
    %v381 = vpop.f32.mrb[0].mxu0
    %v382 = vadd.f32 %v301, %v381
    %v383 = vpop.f32.mrb[0].mxu0
    %v384 = vpop.f32.mrb[0].mxu0
    %v385 = vadd.f32 %v301, %v384
    %v386 = vpop.f32.mrb[0].mxu0
    %387 = vmatprep.mubr.bf16.mxu0 0
    %388 = vmatmul.mubr.bf16.gmra.mrb[0].mxu0 %v334
    %v389 = vpop.f32.mrb[0].mxu0
    %v390 = vadd.f32 %v301, %v389
    %v391 = vpop.f32.mrb[0].mxu0
    %v392 = vpop.f32.mrb[0].mxu0
    %v393 = vadd.f32 %v301, %v392
    %v394 = vpop.f32.mrb[0].mxu0
    %395 = vmatprep.mubr.bf16.mxu0 0
    %396 = vmatmul.mubr.bf16.gmra.mrb[0].mxu0 %v337
    %v397 = vpop.f32.mrb[0].mxu0
    %v398 = vadd.f32 %v301, %v397
    %v399 = vpop.f32.mrb[0].mxu0
    %v400 = vpop.f32.mrb[0].mxu0
    %v401 = vadd.f32 %v301, %v400
    %v402 = vpop.f32.mrb[0].mxu0
    %403 = vdwg.mxu0
    %v404 = vmax.f32 %v374, 0.0
    %v405 = vmax.f32 %v377, 0.0
    %v406 = vmax.f32 %v382, 0.0
    %v407 = vmax.f32 %v385, 0.0
    %v408 = vmax.f32 %v390, 0.0
    %v409 = vmax.f32 %v393, 0.0
    %v410 = vmax.f32 %v398, 0.0
    %v411 = vmax.f32 %v401, 0.0
    %v412 = vld [vmem:[#allocation4] sm:$0xff]
    %v413 = vld [vmem:[#allocation4 + $0x8] sm:$0xff]
    %v414 = vld [vmem:[#allocation4 + $0x10] sm:$0xff]
    %v415 = vld [vmem:[#allocation4 + $0x18] sm:$0xff]
    %v416 = vld [vmem:[#allocation4 + $0x20] sm:$0xff]
    %v417 = vld [vmem:[#allocation4 + $0x28] sm:$0xff]
    %v418 = vld [vmem:[#allocation4 + $0x30] sm:$0xff]
    %v419 = vld [vmem:[#allocation4 + $0x38] sm:$0xff]
    %v420 = vld [vmem:[#allocation4 + $0x40] sm:$0xff]
    %v421 = vld [vmem:[#allocation4 + $0x48] sm:$0xff]
    %v422 = vld [vmem:[#allocation4 + $0x50] sm:$0xff]
    %v423 = vld [vmem:[#allocation4 + $0x58] sm:$0xff]
    %v424 = vld [vmem:[#allocation4 + $0x60] sm:$0xff]
    %v425 = vld [vmem:[#allocation4 + $0x68] sm:$0xff]
    %v426 = vld [vmem:[#allocation4 + $0x70] sm:$0xff]
    %v427 = vld [vmem:[#allocation4 + $0x78] sm:$0xff]
    %v428 = vpack.c.bf16 %v405, %v404
    %v429 = vpack.c.bf16 %v407, %v406
    %v430 = vpack.c.bf16 %v409, %v408
    %v431 = vpack.c.bf16 %v411, %v410
    %v432 = vlaneseq
    %v433 = vshrl.u32 %v432, 7
    %v434 = vsub.s32 2, %v433
    %v435 = vrot.slane %v54, %v434
    %v436 = vlaneseq
    %v437 = vshrl.u32 %v436, 7
    %v438 = vsub.s32 2, %v437
    %v439 = vrot.slane %v55, %v438
    %v456 = vunpack.c.l.b16 %v412
    %v457 = vunpack.c.h.b16 %v412
    %v458 = vunpack.c.l.b16 %v413
    %v459 = vunpack.c.h.b16 %v413
    %v460 = vunpack.c.l.b16 %v414
    %v461 = vunpack.c.h.b16 %v414
    %v462 = vunpack.c.l.b16 %v415
    %v463 = vunpack.c.h.b16 %v415
    %v464 = vunpack.c.l.b16 %v416
    %v465 = vunpack.c.h.b16 %v416
    %v466 = vunpack.c.l.b16 %v417
    %v467 = vunpack.c.h.b16 %v417
    %v468 = vunpack.c.l.b16 %v418
    %v469 = vunpack.c.h.b16 %v418
    %v470 = vunpack.c.l.b16 %v419
    %v471 = vunpack.c.h.b16 %v419
    %v472 = vunpack.c.l.b16 %v420
    %v473 = vunpack.c.h.b16 %v420
    %v474 = vunpack.c.l.b16 %v421
    %v475 = vunpack.c.h.b16 %v421
    %v476 = vunpack.c.l.b16 %v422
    %v477 = vunpack.c.h.b16 %v422
    %v478 = vunpack.c.l.b16 %v423
    %v479 = vunpack.c.h.b16 %v423
    %v480 = vunpack.c.l.b16 %v424
    %v481 = vunpack.c.h.b16 %v424
    %v482 = vunpack.c.l.b16 %v425
    %v483 = vunpack.c.h.b16 %v425
    %v484 = vunpack.c.l.b16 %v426
    %v485 = vunpack.c.h.b16 %v426
    %v486 = vunpack.c.l.b16 %v427
    %v487 = vunpack.c.h.b16 %v427
    %v488 = vpack.c.b16 %v458, %v456
    %v489 = vpack.c.b16 %v459, %v457
    %v490 = vpack.c.b16 %v462, %v460
    %v491 = vpack.c.b16 %v463, %v461
    %v492 = vpack.c.b16 %v466, %v464
    %v493 = vpack.c.b16 %v467, %v465
    %v494 = vpack.c.b16 %v470, %v468
    %v495 = vpack.c.b16 %v471, %v469
    %v496 = vpack.c.b16 %v474, %v472
    %v497 = vpack.c.b16 %v475, %v473
    %v498 = vpack.c.b16 %v478, %v476
    %v499 = vpack.c.b16 %v479, %v477
    %v500 = vpack.c.b16 %v482, %v480
    %v501 = vpack.c.b16 %v483, %v481
    %v502 = vpack.c.b16 %v486, %v484
    %v503 = vpack.c.b16 %v487, %v485
    %520 = vmatprep.subr.bf16.mxu0 %v489
    %521 = vmatpush1.bf16.msra.mxu0 %v488
    %522 = vmatprep.subr.bf16.mxu0 %v491
    %523 = vmatpush1.bf16.msra.mxu0 %v490
    %524 = vmatprep.subr.bf16.mxu0 %v493
    %525 = vmatpush1.bf16.msra.mxu0 %v492
    %526 = vmatprep.subr.bf16.mxu0 %v495
    %527 = vmatpush1.bf16.msra.mxu0 %v494
    %528 = vmatprep.subr.bf16.mxu0 %v497
    %529 = vmatpush1.bf16.msra.mxu0 %v496
    %530 = vmatprep.subr.bf16.mxu0 %v499
    %531 = vmatpush1.bf16.msra.mxu0 %v498
    %532 = vmatprep.subr.bf16.mxu0 %v501
    %533 = vmatpush1.bf16.msra.mxu0 %v500
    %534 = vmatprep.subr.bf16.mxu0 %v503
    %535 = vmatpush1.bf16.msra.mxu0 %v502
    %536 = vmatprep.subr.bf16.mxu0 0
    %537 = vmatpush1.bf16.msra.mxu0 0
    %538 = vmatprep.subr.bf16.mxu0 0
    %539 = vmatpush1.bf16.msra.mxu0 0
    %540 = vmatprep.subr.bf16.mxu0 0
    %541 = vmatpush1.bf16.msra.mxu0 0
    %542 = vmatprep.subr.bf16.mxu0 0
    %543 = vmatpush1.bf16.msra.mxu0 0
    %544 = vmatprep.subr.bf16.mxu0 0
    %545 = vmatpush1.bf16.msra.mxu0 0
    %546 = vmatprep.subr.bf16.mxu0 0
    %547 = vmatpush1.bf16.msra.mxu0 0
    %548 = vmatprep.subr.bf16.mxu0 0
    %549 = vmatpush1.bf16.msra.mxu0 0
    %550 = vmatprep.subr.bf16.mxu0 0
    %551 = vmatpush1.bf16.msra.mxu0 0
    %552 = vmatprep.mubr.bf16.mxu0 0
    %553 = vmatmul.mubr.bf16.gmra.mrb[0].mxu0 %v428
    %v554 = vpop.f32.mrb[0].mxu0
    %v555 = vadd.f32 %v435, %v554
    %v556 = vpop.f32.mrb[0].mxu0
    %v557 = vadd.f32 %v439, %v556
    %v558 = vpop.f32.mrb[0].mxu0
    %v559 = vadd.f32 %v435, %v558
    %v560 = vpop.f32.mrb[0].mxu0
    %v561 = vadd.f32 %v439, %v560
    %562 = vmatprep.mubr.bf16.mxu0 0
    %563 = vmatmul.mubr.bf16.gmra.mrb[0].mxu0 %v429
    %v564 = vpop.f32.mrb[0].mxu0
    %v565 = vadd.f32 %v435, %v564
    %v566 = vpop.f32.mrb[0].mxu0
    %v567 = vadd.f32 %v439, %v566
    %v568 = vpop.f32.mrb[0].mxu0
    %v569 = vadd.f32 %v435, %v568
    %v570 = vpop.f32.mrb[0].mxu0
    %v571 = vadd.f32 %v439, %v570
    %572 = vmatprep.mubr.bf16.mxu0 0
    %573 = vmatmul.mubr.bf16.gmra.mrb[0].mxu0 %v430
    %v574 = vpop.f32.mrb[0].mxu0
    %v575 = vadd.f32 %v435, %v574
    %v576 = vpop.f32.mrb[0].mxu0
    %v577 = vadd.f32 %v439, %v576
    %v578 = vpop.f32.mrb[0].mxu0
    %v579 = vadd.f32 %v435, %v578
    %v580 = vpop.f32.mrb[0].mxu0
    %v581 = vadd.f32 %v439, %v580
    %582 = vmatprep.mubr.bf16.mxu0 0
    %583 = vmatmul.mubr.bf16.gmra.mrb[0].mxu0 %v431
    %v584 = vpop.f32.mrb[0].mxu0
    %v585 = vadd.f32 %v435, %v584
    %v586 = vpop.f32.mrb[0].mxu0
    %v587 = vadd.f32 %v439, %v586
    %v588 = vpop.f32.mrb[0].mxu0
    %v589 = vadd.f32 %v435, %v588
    %v590 = vpop.f32.mrb[0].mxu0
    %v591 = vadd.f32 %v439, %v590
    %592 = vdwg.mxu0
    %v593 = vmax.f32 %v555, 0.0
    %v594 = vmax.f32 %v557, 0.0
    %v595 = vmax.f32 %v559, 0.0
    %v596 = vmax.f32 %v561, 0.0
    %v597 = vmax.f32 %v565, 0.0
    %v598 = vmax.f32 %v567, 0.0
    %v599 = vmax.f32 %v569, 0.0
    %v600 = vmax.f32 %v571, 0.0
    %v601 = vmax.f32 %v575, 0.0
    %v602 = vmax.f32 %v577, 0.0
    %v603 = vmax.f32 %v579, 0.0
    %v604 = vmax.f32 %v581, 0.0
    %v605 = vmax.f32 %v585, 0.0
    %v606 = vmax.f32 %v587, 0.0
    %v607 = vmax.f32 %v589, 0.0
    %v608 = vmax.f32 %v591, 0.0
    %v609 = vld [vmem:[#allocation2 + $0x28] sm:$0xf]
    %v610 = vld [vmem:[#allocation2 + $0x2c] sm:$0xf]
    %v611 = vld [vmem:[#allocation2 + $0x30] sm:$0xf]
    %v612 = vld [vmem:[#allocation2 + $0x34] sm:$0xf]
    %v613 = vld [vmem:[#allocation2 + $0x38] sm:$0xf]
    %v614 = vld [vmem:[#allocation2 + $0x3c] sm:$0xf]
    %v615 = vld [vmem:[#allocation2 + $0x40] sm:$0xf]
    %v616 = vld [vmem:[#allocation2 + $0x44] sm:$0xf]
    %v617 = vld [vmem:[#allocation2 + $0x48] sm:$0xf]
    %v618 = vld [vmem:[#allocation2 + $0x4c] sm:$0xf]
    %v619 = vld [vmem:[#allocation2 + $0x50] sm:$0xf]
    %v620 = vld [vmem:[#allocation2 + $0x54] sm:$0xf]
    %v621 = vld [vmem:[#allocation2 + $0x58] sm:$0xf]
    %v622 = vld [vmem:[#allocation2 + $0x5c] sm:$0xf]
    %v623 = vld [vmem:[#allocation2 + $0x60] sm:$0xf]
    %v624 = vld [vmem:[#allocation2 + $0x64] sm:$0xf]
    %v625 = vld [vmem:[#allocation2 + $0x68] sm:$0xf]
    %v626 = vld [vmem:[#allocation2 + $0x6c] sm:$0xf]
    %v627 = vld [vmem:[#allocation2 + $0x70] sm:$0xf]
    %v628 = vld [vmem:[#allocation2 + $0x74] sm:$0xf]
    %v629 = vld [vmem:[#allocation2 + $0x78] sm:$0xf]
    %v630 = vld [vmem:[#allocation2 + $0x7c] sm:$0xf]
    %v631 = vld [vmem:[#allocation2 + $0x80] sm:$0xf]
    %v632 = vld [vmem:[#allocation2 + $0x84] sm:$0xf]
    %v633 = vld [vmem:[#allocation2 + $0x88] sm:$0xf]
    %v634 = vld [vmem:[#allocation2 + $0x8c] sm:$0xf]
    %v635 = vld [vmem:[#allocation2 + $0x90] sm:$0xf]
    %v636 = vld [vmem:[#allocation2 + $0x94] sm:$0xf]
    %v637 = vld [vmem:[#allocation2 + $0x98] sm:$0xf]
    %v638 = vld [vmem:[#allocation2 + $0x9c] sm:$0xf]
    %v639 = vld [vmem:[#allocation2 + $0xa0] sm:$0xf]
    %v640 = vld [vmem:[#allocation2 + $0xa4] sm:$0xf]
    %v641 = vpack.c.bf16 %v595, %v593
    %v642 = vpack.c.bf16 %v596, %v594
    %v643 = vpack.c.bf16 %v599, %v597
    %v644 = vpack.c.bf16 %v600, %v598
    %v645 = vpack.c.bf16 %v603, %v601
    %v646 = vpack.c.bf16 %v604, %v602
    %v647 = vpack.c.bf16 %v607, %v605
    %v648 = vpack.c.bf16 %v608, %v606
    %v649 = vlaneseq
    %v650 = vshrl.u32 %v649, 7
    %v651 = vsub.s32 3, %v650
    %v652 = vrot.slane %v54, %v651
    %v685 = vunpack.c.l.b16 %v609
    %v686 = vunpack.c.l.b16 %v610
    %v687 = vunpack.c.l.b16 %v611
    %v688 = vunpack.c.l.b16 %v612
    %v689 = vunpack.c.l.b16 %v613
    %v690 = vunpack.c.l.b16 %v614
    %v691 = vunpack.c.l.b16 %v615
    %v692 = vunpack.c.l.b16 %v616
    %v693 = vunpack.c.l.b16 %v617
    %v694 = vunpack.c.l.b16 %v618
    %v695 = vunpack.c.l.b16 %v619
    %v696 = vunpack.c.l.b16 %v620
    %v697 = vunpack.c.l.b16 %v621
    %v698 = vunpack.c.l.b16 %v622
    %v699 = vunpack.c.l.b16 %v623
    %v700 = vunpack.c.l.b16 %v624
    %v701 = vunpack.c.l.b16 %v625
    %v702 = vunpack.c.l.b16 %v626
    %v703 = vunpack.c.l.b16 %v627
    %v704 = vunpack.c.l.b16 %v628
    %v705 = vunpack.c.l.b16 %v629
    %v706 = vunpack.c.l.b16 %v630
    %v707 = vunpack.c.l.b16 %v631
    %v708 = vunpack.c.l.b16 %v632
    %v709 = vunpack.c.l.b16 %v633
    %v710 = vunpack.c.l.b16 %v634
    %v711 = vunpack.c.l.b16 %v635
    %v712 = vunpack.c.l.b16 %v636
    %v713 = vunpack.c.l.b16 %v637
    %v714 = vunpack.c.l.b16 %v638
    %v715 = vunpack.c.l.b16 %v639
    %v716 = vunpack.c.l.b16 %v640
    %v717 = vpack.c.b16 %v686, %v685
    %v718 = vpack.c.b16 %v688, %v687
    %v719 = vpack.c.b16 %v690, %v689
    %v720 = vpack.c.b16 %v692, %v691
    %v721 = vpack.c.b16 %v694, %v693
    %v722 = vpack.c.b16 %v696, %v695
    %v723 = vpack.c.b16 %v698, %v697
    %v724 = vpack.c.b16 %v700, %v699
    %v725 = vpack.c.b16 %v702, %v701
    %v726 = vpack.c.b16 %v704, %v703
    %v727 = vpack.c.b16 %v706, %v705
    %v728 = vpack.c.b16 %v708, %v707
    %v729 = vpack.c.b16 %v710, %v709
    %v730 = vpack.c.b16 %v712, %v711
    %v731 = vpack.c.b16 %v714, %v713
    %v732 = vpack.c.b16 %v716, %v715
    %749 = vmatprep.subr.bf16.mxu0 0
    %750 = vmatpush1.bf16.msra.mxu0 %v717
    %751 = vmatprep.subr.bf16.mxu0 0
    %752 = vmatpush1.bf16.msra.mxu0 %v718
    %753 = vmatprep.subr.bf16.mxu0 0
    %754 = vmatpush1.bf16.msra.mxu0 %v719
    %755 = vmatprep.subr.bf16.mxu0 0
    %756 = vmatpush1.bf16.msra.mxu0 %v720
    %757 = vmatprep.subr.bf16.mxu0 0
    %758 = vmatpush1.bf16.msra.mxu0 %v721
    %759 = vmatprep.subr.bf16.mxu0 0
    %760 = vmatpush1.bf16.msra.mxu0 %v722
    %761 = vmatprep.subr.bf16.mxu0 0
    %762 = vmatpush1.bf16.msra.mxu0 %v723
    %763 = vmatprep.subr.bf16.mxu0 0
    %764 = vmatpush1.bf16.msra.mxu0 %v724
    %765 = vmatprep.subr.bf16.mxu0 0
    %766 = vmatpush1.bf16.msra.mxu0 %v725
    %767 = vmatprep.subr.bf16.mxu0 0
    %768 = vmatpush1.bf16.msra.mxu0 %v726
    %769 = vmatprep.subr.bf16.mxu0 0
    %770 = vmatpush1.bf16.msra.mxu0 %v727
    %771 = vmatprep.subr.bf16.mxu0 0
    %772 = vmatpush1.bf16.msra.mxu0 %v728
    %773 = vmatprep.subr.bf16.mxu0 0
    %774 = vmatpush1.bf16.msra.mxu0 %v729
    %775 = vmatprep.subr.bf16.mxu0 0
    %776 = vmatpush1.bf16.msra.mxu0 %v730
    %777 = vmatprep.subr.bf16.mxu0 0
    %778 = vmatpush1.bf16.msra.mxu0 %v731
    %779 = vmatprep.subr.bf16.mxu0 0
    %780 = vmatpush1.bf16.msra.mxu0 %v732
    %781 = vmatprep.mubr.bf16.mxu0 %v642
    %782 = vmatmul.mubr.bf16.gmra.mrb[0].mxu0 %v641
    %v783 = vpop.f32.mrb[0].mxu0
    %v784 = vadd.f32 %v652, %v783
    %v785 = vpop.f32.mrb[0].mxu0
    %v786 = vpop.f32.mrb[0].mxu0
    %v787 = vadd.f32 %v652, %v786
    %v788 = vpop.f32.mrb[0].mxu0
    %789 = vmatprep.mubr.bf16.mxu0 %v644
    %790 = vmatmul.mubr.bf16.gmra.mrb[0].mxu0 %v643
    %v791 = vpop.f32.mrb[0].mxu0
    %v792 = vadd.f32 %v652, %v791
    %v793 = vpop.f32.mrb[0].mxu0
    %v794 = vpop.f32.mrb[0].mxu0
    %v795 = vadd.f32 %v652, %v794
    %v796 = vpop.f32.mrb[0].mxu0
    %797 = vmatprep.mubr.bf16.mxu0 %v646
    %798 = vmatmul.mubr.bf16.gmra.mrb[0].mxu0 %v645
    %v799 = vpop.f32.mrb[0].mxu0
    %v800 = vadd.f32 %v652, %v799
    %v801 = vpop.f32.mrb[0].mxu0
    %v802 = vpop.f32.mrb[0].mxu0
    %v803 = vadd.f32 %v652, %v802
    %v804 = vpop.f32.mrb[0].mxu0
    %805 = vmatprep.mubr.bf16.mxu0 %v648
    %806 = vmatmul.mubr.bf16.gmra.mrb[0].mxu0 %v647
    %v807 = vpop.f32.mrb[0].mxu0
    %v808 = vadd.f32 %v652, %v807
    %v809 = vpop.f32.mrb[0].mxu0
    %v810 = vpop.f32.mrb[0].mxu0
    %v811 = vadd.f32 %v652, %v810
    %v812 = vpop.f32.mrb[0].mxu0
    %813 = vdwg.mxu0
    %v814 = vmax.f32 %v784, 0.0
    %v815 = vmax.f32 %v787, 0.0
    %v816 = vmax.f32 %v792, 0.0
    %v817 = vmax.f32 %v795, 0.0
    %v818 = vmax.f32 %v800, 0.0
    %v819 = vmax.f32 %v803, 0.0
    %v820 = vmax.f32 %v808, 0.0
    %v821 = vmax.f32 %v811, 0.0
    %v822 = vld [vmem:[#allocation2 + $0xa8] sm:$0xf]
    %v823 = vld [vmem:[#allocation2 + $0xac] sm:$0xf]
    %v824 = vld [vmem:[#allocation2 + $0xb0] sm:$0xf]
    %v825 = vld [vmem:[#allocation2 + $0xb4] sm:$0xf]
    %v826 = vld [vmem:[#allocation2 + $0xb8] sm:$0xf]
    %v827 = vld [vmem:[#allocation2 + $0xbc] sm:$0xf]
    %v828 = vld [vmem:[#allocation2 + $0xc0] sm:$0xf]
    %v829 = vld [vmem:[#allocation2 + $0xc4] sm:$0xf]
    %v830 = vpack.c.bf16 %v815, %v814
    %v831 = vpack.c.bf16 %v817, %v816
    %v832 = vpack.c.bf16 %v819, %v818
    %v833 = vpack.c.bf16 %v821, %v820
    %v834 = vlaneseq
    %v835 = vshrl.u32 %v834, 7
    %v836 = vsub.s32 4, %v835
    %v837 = vrot.slane %v54, %v836
    %v846 = vunpack.c.l.b16 %v822
    %v847 = vunpack.c.l.b16 %v823
    %v848 = vunpack.c.l.b16 %v824
    %v849 = vunpack.c.l.b16 %v825
    %v850 = vunpack.c.l.b16 %v826
    %v851 = vunpack.c.l.b16 %v827
    %v852 = vunpack.c.l.b16 %v828
    %v853 = vunpack.c.l.b16 %v829
    %v854 = vpack.c.b16 %v847, %v846
    %v855 = vpack.c.b16 %v849, %v848
    %v856 = vpack.c.b16 %v851, %v850
    %v857 = vpack.c.b16 %v853, %v852
    %v863 = vsel %vm326, %v830, 0
    %v866 = vsel %vm326, %v831, 0
    %v869 = vsel %vm326, %v832, 0
    %v872 = vsel %vm326, %v833, 0
    %874 = vmatprep.subr.bf16.mxu0 0
    %875 = vmatpush1.bf16.msra.mxu0 %v854
    %876 = vmatprep.subr.bf16.mxu0 0
    %877 = vmatpush1.bf16.msra.mxu0 %v855
    %878 = vmatprep.subr.bf16.mxu0 0
    %879 = vmatpush1.bf16.msra.mxu0 %v856
    %880 = vmatprep.subr.bf16.mxu0 0
    %881 = vmatpush1.bf16.msra.mxu0 %v857
    %882 = vmatprep.subr.bf16.mxu0 0
    %883 = vmatpush1.bf16.msra.mxu0 0
    %884 = vmatprep.subr.bf16.mxu0 0
    %885 = vmatpush1.bf16.msra.mxu0 0
    %886 = vmatprep.subr.bf16.mxu0 0
    %887 = vmatpush1.bf16.msra.mxu0 0
    %888 = vmatprep.subr.bf16.mxu0 0
    %889 = vmatpush1.bf16.msra.mxu0 0
    %890 = vmatprep.subr.bf16.mxu0 0
    %891 = vmatpush1.bf16.msra.mxu0 0
    %892 = vmatprep.subr.bf16.mxu0 0
    %893 = vmatpush1.bf16.msra.mxu0 0
    %894 = vmatprep.subr.bf16.mxu0 0
    %895 = vmatpush1.bf16.msra.mxu0 0
    %896 = vmatprep.subr.bf16.mxu0 0
    %897 = vmatpush1.bf16.msra.mxu0 0
    %898 = vmatprep.subr.bf16.mxu0 0
    %899 = vmatpush1.bf16.msra.mxu0 0
    %900 = vmatprep.subr.bf16.mxu0 0
    %901 = vmatpush1.bf16.msra.mxu0 0
    %902 = vmatprep.subr.bf16.mxu0 0
    %903 = vmatpush1.bf16.msra.mxu0 0
    %904 = vmatprep.subr.bf16.mxu0 0
    %905 = vmatpush1.bf16.msra.mxu0 0
    %906 = vmatprep.mubr.bf16.mxu0 0
    %907 = vmatmul.mubr.bf16.gmra.mrb[0].mxu0 %v863
    %v908 = vpop.f32.mrb[0].mxu0
    %v909 = vadd.f32 %v837, %v908
    %v910 = vpop.f32.mrb[0].mxu0
    %v911 = vpop.f32.mrb[0].mxu0
    %v912 = vadd.f32 %v837, %v911
    %v913 = vpop.f32.mrb[0].mxu0
    %914 = vmatprep.mubr.bf16.mxu0 0
    %915 = vmatmul.mubr.bf16.gmra.mrb[0].mxu0 %v866
    %v916 = vpop.f32.mrb[0].mxu0
    %v917 = vadd.f32 %v837, %v916
    %v918 = vpop.f32.mrb[0].mxu0
    %v919 = vpop.f32.mrb[0].mxu0
    %v920 = vadd.f32 %v837, %v919
    %v921 = vpop.f32.mrb[0].mxu0
    %922 = vmatprep.mubr.bf16.mxu0 0
    %923 = vmatmul.mubr.bf16.gmra.mrb[0].mxu0 %v869
    %v924 = vpop.f32.mrb[0].mxu0
    %v925 = vadd.f32 %v837, %v924
    %v926 = vpop.f32.mrb[0].mxu0
    %v927 = vpop.f32.mrb[0].mxu0
    %v928 = vadd.f32 %v837, %v927
    %v929 = vpop.f32.mrb[0].mxu0
    %930 = vmatprep.mubr.bf16.mxu0 0
    %931 = vmatmul.mubr.bf16.gmra.mrb[0].mxu0 %v872
    %v932 = vpop.f32.mrb[0].mxu0
    %v933 = vadd.f32 %v837, %v932
    %v934 = vpop.f32.mrb[0].mxu0
    %v935 = vpop.f32.mrb[0].mxu0
    %v936 = vadd.f32 %v837, %v935
    %v937 = vpop.f32.mrb[0].mxu0
    %938 = vdwg.mxu0
    %v939 = vmax.f32 %v909, 0.0
    %v940 = vmax.f32 %v912, 0.0
    %v941 = vmax.f32 %v917, 0.0
    %v942 = vmax.f32 %v920, 0.0
    %v943 = vmax.f32 %v925, 0.0
    %v944 = vmax.f32 %v928, 0.0
    %v945 = vmax.f32 %v933, 0.0
    %v946 = vmax.f32 %v936, 0.0
    %v947 = vld [vmem:[#allocation2 + $0xc8] sm:$0xf]
    %v948 = vld [vmem:[#allocation2 + $0xcc] sm:$0xf]
    %v949 = vld [vmem:[#allocation2 + $0xd0] sm:$0xf]
    %v950 = vld [vmem:[#allocation2 + $0xd4] sm:$0xf]
    %v951 = vld [vmem:[#allocation2 + $0xd8] sm:$0xf]
    %v952 = vld [vmem:[#allocation2 + $0xdc] sm:$0xf]
    %v953 = vld [vmem:[#allocation2 + $0xe0] sm:$0xf]
    %v954 = vld [vmem:[#allocation2 + $0xe4] sm:$0xf]
    %v955 = vpack.c.bf16 %v940, %v939
    %v956 = vpack.c.bf16 %v942, %v941
    %v957 = vpack.c.bf16 %v944, %v943
    %v958 = vpack.c.bf16 %v946, %v945
    %v959 = vlaneseq
    %v960 = vshrl.u32 %v959, 7
    %v961 = vsub.s32 5, %v960
    %v962 = vrot.slane %v54, %v961
    %v971 = vunpack.c.l.b16 %v947
    %v972 = vunpack.c.l.b16 %v948
    %v973 = vunpack.c.l.b16 %v949
    %v974 = vunpack.c.l.b16 %v950
    %v975 = vunpack.c.l.b16 %v951
    %v976 = vunpack.c.l.b16 %v952
    %v977 = vunpack.c.l.b16 %v953
    %v978 = vunpack.c.l.b16 %v954
    %v979 = vpack.c.b16 %v972, %v971
    %v980 = vpack.c.b16 %v974, %v973
    %v981 = vpack.c.b16 %v976, %v975
    %v982 = vpack.c.b16 %v978, %v977
    %v988 = vsel %vm326, %v955, 0
    %v991 = vsel %vm326, %v956, 0
    %v994 = vsel %vm326, %v957, 0
    %v997 = vsel %vm326, %v958, 0
    %999 = vmatprep.subr.bf16.mxu0 0
    %1000 = vmatpush1.bf16.msra.mxu0 %v979
    %1001 = vmatprep.subr.bf16.mxu0 0
    %1002 = vmatpush1.bf16.msra.mxu0 %v980
    %1003 = vmatprep.subr.bf16.mxu0 0
    %1004 = vmatpush1.bf16.msra.mxu0 %v981
    %1005 = vmatprep.subr.bf16.mxu0 0
    %1006 = vmatpush1.bf16.msra.mxu0 %v982
    %1007 = vmatprep.subr.bf16.mxu0 0
    %1008 = vmatpush1.bf16.msra.mxu0 0
    %1009 = vmatprep.subr.bf16.mxu0 0
    %1010 = vmatpush1.bf16.msra.mxu0 0
    %1011 = vmatprep.subr.bf16.mxu0 0
    %1012 = vmatpush1.bf16.msra.mxu0 0
    %1013 = vmatprep.subr.bf16.mxu0 0
    %1014 = vmatpush1.bf16.msra.mxu0 0
    %1015 = vmatprep.subr.bf16.mxu0 0
    %1016 = vmatpush1.bf16.msra.mxu0 0
    %1017 = vmatprep.subr.bf16.mxu0 0
    %1018 = vmatpush1.bf16.msra.mxu0 0
    %1019 = vmatprep.subr.bf16.mxu0 0
    %1020 = vmatpush1.bf16.msra.mxu0 0
    %1021 = vmatprep.subr.bf16.mxu0 0
    %1022 = vmatpush1.bf16.msra.mxu0 0
    %1023 = vmatprep.subr.bf16.mxu0 0
    %1024 = vmatpush1.bf16.msra.mxu0 0
    %1025 = vmatprep.subr.bf16.mxu0 0
    %1026 = vmatpush1.bf16.msra.mxu0 0
    %1027 = vmatprep.subr.bf16.mxu0 0
    %1028 = vmatpush1.bf16.msra.mxu0 0
    %1029 = vmatprep.subr.bf16.mxu0 0
    %1030 = vmatpush1.bf16.msra.mxu0 0
    %1031 = vmatprep.mubr.bf16.mxu0 0
    %1032 = vmatmul.mubr.bf16.gmra.mrb[0].mxu0 %v988
    %v1033 = vpop.f32.mrb[0].mxu0
    %v1034 = vadd.f32 %v962, %v1033
    %v1035 = vpop.f32.mrb[0].mxu0
    %v1036 = vpop.f32.mrb[0].mxu0
    %v1037 = vadd.f32 %v962, %v1036
    %v1038 = vpop.f32.mrb[0].mxu0
    %1039 = vmatprep.mubr.bf16.mxu0 0
    %1040 = vmatmul.mubr.bf16.gmra.mrb[0].mxu0 %v991
    %v1041 = vpop.f32.mrb[0].mxu0
    %v1042 = vadd.f32 %v962, %v1041
    %v1043 = vpop.f32.mrb[0].mxu0
    %v1044 = vpop.f32.mrb[0].mxu0
    %v1045 = vadd.f32 %v962, %v1044
    %v1046 = vpop.f32.mrb[0].mxu0
    %1047 = vmatprep.mubr.bf16.mxu0 0
    %1048 = vmatmul.mubr.bf16.gmra.mrb[0].mxu0 %v994
    %v1049 = vpop.f32.mrb[0].mxu0
    %v1050 = vadd.f32 %v962, %v1049
    %v1051 = vpop.f32.mrb[0].mxu0
    %v1052 = vpop.f32.mrb[0].mxu0
    %v1053 = vadd.f32 %v962, %v1052
    %v1054 = vpop.f32.mrb[0].mxu0
    %1055 = vmatprep.mubr.bf16.mxu0 0
    %1056 = vmatmul.mubr.bf16.gmra.mrb[0].mxu0 %v997
    %v1057 = vpop.f32.mrb[0].mxu0
    %v1058 = vadd.f32 %v962, %v1057
    %v1059 = vpop.f32.mrb[0].mxu0
    %v1060 = vpop.f32.mrb[0].mxu0
    %v1061 = vadd.f32 %v962, %v1060
    %v1062 = vpop.f32.mrb[0].mxu0
    %1063 = vdwg.mxu0
    %vm1064 = vcmask 15360
    %1065 = vst.msk [vmem:[%s4] sm:$0xff] %vm1064, %v1034
    %1066 = vst.msk [vmem:[%s4 + $0x8] sm:$0xff] %vm1064, %v1037
    %1067 = vst.msk [vmem:[%s4 + $0x10] sm:$0xff] %vm1064, %v1042
    %1068 = vst.msk [vmem:[%s4 + $0x18] sm:$0xff] %vm1064, %v1045
    %1069 = vst.msk [vmem:[%s4 + $0x20] sm:$0xff] %vm1064, %v1050
    %1070 = vst.msk [vmem:[%s4 + $0x28] sm:$0xff] %vm1064, %v1053
    %1071 = vst.msk [vmem:[%s4 + $0x30] sm:$0xff] %vm1064, %v1058
    %1072 = vst.msk [vmem:[%s4 + $0x38] sm:$0xff] %vm1064, %v1061
    // Predicated region
    $region26: #{log1dnet_v3_forward.1} parent=1 // pred_check
      _
    $region27: #{log1dnet_v3_forward.1} parent=1 // pred_check_branch
      %1074 = sbr.rel (0) target = $region29
    $region28: #{log1dnet_v3_forward.1} parent=1 // pred_region
      _
    $region29: #{log1dnet_v3_forward.1} parent=1 // pred_fallthru
      _
    // Predicated region
    $region30: #{log1dnet_v3_forward.1} parent=1 // pred_check
      _
    $region31: #{log1dnet_v3_forward.1} parent=1 // pred_check_branch
      %1076 = sbr.rel (0) target = $region33
    $region32: #{log1dnet_v3_forward.1} parent=1 // pred_region
      _
    $region33: #{log1dnet_v3_forward.1} parent=1 // pred_fallthru
      _
    %1077 = vsyncpa [#allocation3], 1
    %1078 = vsyncpa [#allocation5], 1

</llo_original>
